<compile_context>
chip_gen: v7x
topology: tpu7x:2x2x1
jax: 0.10.0
libtpu: 0.0.40
codegen_flags: <defaults>
</compile_context>

<pallas_src>
import jax
import jax.numpy as jnp
from jax.experimental import pallas as pl
from jax.experimental.pallas import tpu as pltpu


def _round_up(n, m):
    return ((n + m - 1) // m) * m


def _vmem_budget_bytes():
    """(tile-picking budget, vmem_limit_bytes) derived from this chip's VMEM."""
    cap = 64 * 1024 * 1024
    try:
        cap = int(getattr(pltpu.get_tpu_info(), "vmem_capacity_bytes", cap))
    except Exception:
        pass
    if cap >= 96 * 1024 * 1024:                       # v5e / v6e: 128 MiB
        return 48 * 1024 * 1024, 64 * 1024 * 1024
    return 24 * 1024 * 1024, 48 * 1024 * 1024         # v7x: 64 MiB per TC


def _pick_tile_n(n, l, d, c, w_itemsize, compute_itemsize, budget_bytes):
    """Largest row tile (multiple of 128) whose working set fits the budget."""
    tile = 128
    for t in (2048, 1024, 512, 256, 128):
        est = (2 * t * l * 4                              # double-buffered f32 x tiles
               + 2 * t * c * 4                            # double-buffered f32 out tiles
               + 2 * (l * 2 * d + d * c) * w_itemsize     # resident weights (2 bufs)
               + t * 4 * d * 4                            # f32 intermediates (h, a, b)
               + t * 2 * d * compute_itemsize)            # gated in compute dtype
        if est <= budget_bytes:
            tile = t
            break
    # v7x megacore: avoid leaving a TensorCore idle when N would fit one tile.
    while tile > 256 and (n + tile - 1) // tile < 2:
        tile //= 2
    # Never larger than the (8-aligned) row count.
    tile = min(tile, _round_up(max(n, 1), 8))
    return max(tile, 8)


def _make_kernel(n_rows, tile_n, compute_dtype):
    ragged = (n_rows % tile_n) != 0

    def kernel(x_ref, wab_ref, bab_ref, wc_ref, bc_ref, out_ref):
        # x_ref:   (TILE_N, L)  f32 straight from HBM (no wrapper astype/pad)
        # wab_ref: (L, 2D)      compute dtype   [Wa | Wb] fused
        # bab_ref: (1, 2D)      f32             [ba | bb]
        # wc_ref:  (D, C)       compute dtype
        # bc_ref:  (1, C)       f32
        # out_ref: (TILE_N, C)  f32
        x = x_ref[...]
        if ragged:
            # Zero the tail rows of the edge block so no garbage flows through
            # tanh/sigmoid (out-of-bounds output rows are dropped on writeback).
            row = jax.lax.broadcasted_iota(jnp.int32, x.shape, 0)
            x = jnp.where(row + pl.program_id(0) * tile_n < n_rows, x, 0.0)
        xc = x.astype(compute_dtype)              # in-kernel cast, hidden under MXU

        # One wide first-layer GEMM on the MXU, f32 accumulation.
        h = jnp.dot(xc, wab_ref[...], preferred_element_type=jnp.float32)
        h = h + bab_ref[...]                      # (TILE_N, 2D) f32
        d = h.shape[-1] // 2                      # D (128-aligned for CLAM's 256)
        a = jnp.tanh(h[:, :d])                    # EUP
        b = jax.nn.sigmoid(h[:, d:])
        gated = (a * b).astype(compute_dtype)     # (TILE_N, D)

        # Second GEMM in standard orientation: no transpose of `gated` needed.
        acc = jnp.dot(gated, wc_ref[...], preferred_element_type=jnp.float32)
        out_ref[...] = acc + bc_ref[...]          # (TILE_N, C) f32

    return kernel


def attn_net_gated_forward(x, wa, ba, wb, bb, wc, bc,
                           compute_dtype=jnp.bfloat16):
    """Pallas forward of Attn_Net_Gated. x:(N,L) f32. Returns (A:(N,C) f32, x)."""
    N, L = x.shape
    D = wa.shape[1]
    C = wc.shape[1]

    w_itemsize = jnp.dtype(compute_dtype).itemsize
    budget, vmem_limit = _vmem_budget_bytes()
    tile_n = _pick_tile_n(N, L, D, C, w_itemsize, w_itemsize, budget)
    num_tiles = (N + tile_n - 1) // tile_n

    # Tiny one-time parameter prep (stays resident in VMEM across grid steps).
    w_ab = jnp.concatenate([wa, wb], axis=1).astype(compute_dtype)            # (L, 2D)
    b_ab = jnp.concatenate([ba, bb], axis=0).reshape(1, 2 * D).astype(jnp.float32)
    wc_c = wc.astype(compute_dtype)                                           # (D, C)
    bc2 = bc.reshape(1, C).astype(jnp.float32)

    cost = pl.CostEstimate(
        flops=2 * N * L * 2 * D + 2 * N * D * C,
        transcendentals=2 * N * D,
        bytes_accessed=(N * L * x.dtype.itemsize
                        + (L * 2 * D + D * C) * w_itemsize
                        + (2 * D + C) * 4
                        + N * C * 4),
    )

    A = pl.pallas_call(
        _make_kernel(N, tile_n, compute_dtype),
        out_shape=jax.ShapeDtypeStruct((N, C), jnp.float32),
        grid=(num_tiles,),
        in_specs=[
            pl.BlockSpec((tile_n, L), lambda i: (i, 0)),    # streamed f32 x tile
            pl.BlockSpec((L, 2 * D), lambda i: (0, 0)),     # resident fused weight
            pl.BlockSpec((1, 2 * D), lambda i: (0, 0)),     # resident fused bias
            pl.BlockSpec((D, C), lambda i: (0, 0)),         # resident Wc
            pl.BlockSpec((1, C), lambda i: (0, 0)),         # resident bc
        ],
        out_specs=pl.BlockSpec((tile_n, C), lambda i: (i, 0)),
        compiler_params=pltpu.CompilerParams(
            dimension_semantics=("parallel",),
            vmem_limit_bytes=vmem_limit,
        ),
        cost_estimate=cost,
    )(x, w_ab, b_ab, wc_c, bc2)

    return A, x


def init_params(key, L, D, n_classes):
    """Deterministic init mimicking nn.Linear's uniform(-1/sqrt(fan_in), ...)."""
    ks = jax.random.split(key, 6)

    def lin(kw, kb, fan_in, fan_out):
        bound = 1.0 / jnp.sqrt(fan_in)
        w = jax.random.uniform(kw, (fan_in, fan_out), jnp.float32, -bound, bound)
        b = jax.random.uniform(kb, (fan_out,), jnp.float32, -bound, bound)
        return w, b

    wa, ba = lin(ks[0], ks[1], L, D)
    wb, bb = lin(ks[2], ks[3], L, D)
    wc, bc = lin(ks[4], ks[5], D, n_classes)
    return wa, ba, wb, bb, wc, bc


if __name__ == "__main__":
    # Small shapes consistent with the module: N bag instances, L input
    # features, D hidden, n_classes attention heads.
    N, L, D, n_classes = 8, 32, 16, 1

    key = jax.random.PRNGKey(0)
    kx, kp = jax.random.split(key)
    x = jax.random.normal(kx, (N, L), dtype=jnp.float32)
    wa, ba, wb, bb, wc, bc = init_params(kp, L, D, n_classes)

    # Plain-JAX f32 reference of the PyTorch forward.
    a_ref = jnp.tanh(x @ wa + ba)
    b_ref = jax.nn.sigmoid(x @ wb + bb)
    A_ref = (a_ref * b_ref) @ wc + bc

    # 1) f32 compute path — tight check.
    A32, x_out = attn_net_gated_forward(x, wa, ba, wb, bb, wc, bc,
                                        compute_dtype=jnp.float32)
    jax.block_until_ready((A32, x_out))
    assert A32.shape == (N, n_classes)
    assert x_out.shape == (N, L)
    assert jnp.allclose(A32, A_ref, atol=1e-4, rtol=1e-4)
    assert jnp.array_equal(x_out, x)

    # 2) default bf16-MXU path — looser tolerance (bf16 matmul inputs,
    #    f32 accumulation and f32 activations).
    Abf, x_out2 = attn_net_gated_forward(x, wa, ba, wb, bb, wc, bc)
    jax.block_until_ready((Abf, x_out2))
    assert Abf.shape == (N, n_classes)
    assert jnp.allclose(Abf, A_ref, atol=3e-2, rtol=3e-2)
    assert jnp.array_equal(x_out2, x)

    # 3) ragged N (not a multiple of the row tile): exercises the unpadded
    #    edge-block path that replaced the wrapper-side jnp.pad.
    N2 = 13
    x2 = jax.random.normal(jax.random.PRNGKey(1), (N2, L), dtype=jnp.float32)
    A2_ref = (jnp.tanh(x2 @ wa + ba) * jax.nn.sigmoid(x2 @ wb + bb)) @ wc + bc
    A2, x2_out = attn_net_gated_forward(x2, wa, ba, wb, bb, wc, bc,
                                        compute_dtype=jnp.float32)
    jax.block_until_ready((A2, x2_out))
    assert A2.shape == (N2, n_classes)
    assert jnp.allclose(A2, A2_ref, atol=1e-4, rtol=1e-4)
    assert jnp.array_equal(x2_out, x2)

    print("KERNEL_OK")
</pallas_src>

<mosaic_0001>
module attributes {stable_mosaic.version = 11 : i64} {
  func.func @kernel(%arg0: i32, %arg1: memref<8x32xf32, #tpu.memory_space<vmem>>, %arg2: memref<32x32xf32, #tpu.memory_space<vmem>>, %arg3: memref<1x32xf32, #tpu.memory_space<vmem>>, %arg4: memref<16x1xf32, #tpu.memory_space<vmem>>, %arg5: memref<1x1xf32, #tpu.memory_space<vmem>>, %arg6: memref<8x1xf32, #tpu.memory_space<vmem>>) attributes {dimension_semantics = [#tpu.dimension_semantics<parallel>], iteration_bounds = array<i64: 1>, scalar_prefetch = 0 : i64, scratch_operands = 0 : i64, tpu.core_type = #tpu.core_type<tc>, window_params = [{transform_indices = @transform_0, window_bounds = array<i64: 8, 32>}, {pipeline_mode = #tpu.pipeline_mode<synchronous>, transform_indices = @transform_1, window_bounds = array<i64: 32, 32>}, {pipeline_mode = #tpu.pipeline_mode<synchronous>, transform_indices = @transform_2, window_bounds = array<i64: 1, 32>}, {pipeline_mode = #tpu.pipeline_mode<synchronous>, transform_indices = @transform_3, window_bounds = array<i64: 16, 1>}, {pipeline_mode = #tpu.pipeline_mode<synchronous>, transform_indices = @transform_4, window_bounds = array<i64: 1, 1>}, {transform_indices = @transform_5, window_bounds = array<i64: 8, 1>}]} {
    %c0 = arith.constant 0 : index
    %c0_0 = arith.constant 0 : index
    %0 = vector.load %arg1[%c0, %c0_0] : memref<8x32xf32, #tpu.memory_space<vmem>>, vector<8x32xf32>
    %c0_1 = arith.constant 0 : index
    %c0_2 = arith.constant 0 : index
    %1 = vector.load %arg2[%c0_1, %c0_2] : memref<32x32xf32, #tpu.memory_space<vmem>>, vector<32x32xf32>
    %cst = arith.constant dense<0.000000e+00> : vector<8x32xf32>
    %2 = tpu.matmul %0, %1, %cst {dimension_numbers = #tpu.dot_dimension_numbers<[1], [0], [0], [1], [0, 0, 1, 1], [], []>} : vector<8x32xf32>, vector<32x32xf32>, vector<8x32xf32> -> vector<8x32xf32>
    %c0_3 = arith.constant 0 : index
    %c0_4 = arith.constant 0 : index
    %3 = vector.load %arg3[%c0_3, %c0_4] : memref<1x32xf32, #tpu.memory_space<vmem>>, vector<1x32xf32>
    %4 = vector.broadcast %3 : vector<1x32xf32> to vector<8x32xf32>
    %5 = arith.addf %2, %4 : vector<8x32xf32>
    %6 = vector.extract_strided_slice %5 {offsets = [0, 0], sizes = [8, 16], strides = [1, 1]} : vector<8x32xf32> to vector<8x16xf32>
    %7 = math.tanh %6 : vector<8x16xf32>
    %8 = vector.extract_strided_slice %5 {offsets = [0, 16], sizes = [8, 16], strides = [1, 1]} : vector<8x32xf32> to vector<8x16xf32>
    %9 = arith.negf %8 : vector<8x16xf32>
    %10 = math.exp %9 : vector<8x16xf32>
    %cst_5 = arith.constant 1.000000e+00 : f32
    %11 = vector.broadcast %cst_5 : f32 to vector<8x16xf32>
    %12 = arith.addf %11, %10 : vector<8x16xf32>
    %13 = arith.divf %11, %12 : vector<8x16xf32>
    %14 = arith.mulf %7, %13 : vector<8x16xf32>
    %c0_6 = arith.constant 0 : index
    %c0_7 = arith.constant 0 : index
    %15 = vector.load %arg4[%c0_6, %c0_7] : memref<16x1xf32, #tpu.memory_space<vmem>>, vector<16x1xf32>
    %cst_8 = arith.constant dense<0.000000e+00> : vector<8x1xf32>
    %16 = tpu.matmul %14, %15, %cst_8 {dimension_numbers = #tpu.dot_dimension_numbers<[1], [0], [0], [1], [0, 0, 1, 1], [], []>} : vector<8x16xf32>, vector<16x1xf32>, vector<8x1xf32> -> vector<8x1xf32>
    %c0_9 = arith.constant 0 : index
    %c0_10 = arith.constant 0 : index
    %17 = vector.load %arg5[%c0_9, %c0_10] : memref<1x1xf32, #tpu.memory_space<vmem>>, vector<1x1xf32>
    %18 = vector.broadcast %17 : vector<1x1xf32> to vector<8x1xf32>
    %19 = arith.addf %16, %18 : vector<8x1xf32>
    %c0_11 = arith.constant 0 : index
    %c0_12 = arith.constant 0 : index
    %20 = vector.load %arg6[%c0_11, %c0_12] : memref<8x1xf32, #tpu.memory_space<vmem>>, vector<8x1xf32>
    tpu.vector_store %arg6[%c0_11, %c0_12], %19 {strides = array<i32>} : memref<8x1xf32, #tpu.memory_space<vmem>>, vector<8x1xf32>,
    return
  }
  func.func @transform_0(%arg0: i32) -> (i32, i32) {
    %c0_i32 = arith.constant 0 : i32
    %c0_i32_0 = arith.constant 0 : i32
    return %arg0, %c0_i32 : i32, i32
  }
  func.func @transform_1(%arg0: i32) -> (i32, i32) {
    %c0_i32 = arith.constant 0 : i32
    %c0_i32_0 = arith.constant 0 : i32
    %c0_i32_1 = arith.constant 0 : i32
    return %c0_i32, %c0_i32_0 : i32, i32
  }
  func.func @transform_2(%arg0: i32) -> (i32, i32) {
    %c0_i32 = arith.constant 0 : i32
    %c0_i32_0 = arith.constant 0 : i32
    %c0_i32_1 = arith.constant 0 : i32
    return %c0_i32, %c0_i32_0 : i32, i32
  }
  func.func @transform_3(%arg0: i32) -> (i32, i32) {
    %c0_i32 = arith.constant 0 : i32
    %c0_i32_0 = arith.constant 0 : i32
    %c0_i32_1 = arith.constant 0 : i32
    return %c0_i32, %c0_i32_0 : i32, i32
  }
  func.func @transform_4(%arg0: i32) -> (i32, i32) {
    %c0_i32 = arith.constant 0 : i32
    %c0_i32_0 = arith.constant 0 : i32
    %c0_i32_1 = arith.constant 0 : i32
    return %c0_i32, %c0_i32_0 : i32, i32
  }
  func.func @transform_5(%arg0: i32) -> (i32, i32) {
    %c0_i32 = arith.constant 0 : i32
    %c0_i32_0 = arith.constant 0 : i32
    return %arg0, %c0_i32 : i32, i32
  }
}

</mosaic_0001>

<llo_original>
// kernel: tpu_custom_call.1
$region0: #{tpu_custom_call.1}
  #allocation0 [shape = 'u32[]', space=smem, size = 0x4, offset = 0x4, fixed_abs, tag = 'smem constant byte address 0x4 - core index']
  #allocation1 [shape = 'u32[144,128]{1,0:T(1,128)}', space=vmem, size = 0x12000, scoped, tag = 'internal scratch']
  #allocation2 [shape = 'f32[1,1]{1,0:T(1,128)S(1)}', space=vmem, size = 0x200, scoped, tag = 'scoped memory for tpu_custom_call.1']
  %s0 = inlined_call_operand.vmem [shape: f32[8,32], index: 0, kind: input, shape index: {}]
  %s1 = inlined_call_operand.hbm [shape: f32[32,32], index: 1, kind: input, shape index: {}]
  %s2 = inlined_call_operand.vmem [shape: f32[1,32], index: 2, kind: input, shape index: {}]
  %s3 = inlined_call_operand.vmem [shape: f32[16,1], index: 3, kind: input, shape index: {}]
  %s4 = inlined_call_operand.<no memory space> [shape: f32[1,1], index: 4, kind: input, shape index: {}]
  %s5 = inlined_call_operand.vmem [shape: f32[8,1], index: 5, kind: output, shape index: {}]
  %s6 = sld [smem:[#allocation0]]
  $region34: #{tpu_custom_call.1} parent=0
    _
  %s8 = ssub.s32 1, %s6
  %s9 = scalar_select 0, %s8, %s6
  %v10 = vstv %s4
  %11 = vst [vmem:[#allocation2] sm:$0x1] %v10
  $region1: #{tpu_custom_call.1} parent=0
    #allocation3 [shape = 'u8[16384]{0}', space=vmem, size = 0x4000, scoped, tag = 'input window, operand 1, single buffered']
    #allocation4 [shape = 's32[1]{0}', space=sflag, size = 0x4, scoped, tag = 'scoped memory for tpu_custom_call.1']
    %12 = vsyncpa [#allocation4], 0
    // Predicated region
    $region2: #{tpu_custom_call.1} parent=1 // pred_check
      _
    $region3: #{tpu_custom_call.1} parent=1 // pred_check_branch
      %14 = sbr.rel (0) target = $region5
    $region4: #{tpu_custom_call.1} parent=1 // pred_region
      _
    $region5: #{tpu_custom_call.1} parent=1 // pred_fallthru
      _
    // Predicated region
    $region6: #{tpu_custom_call.1} parent=1 // pred_check
      _
    $region7: #{tpu_custom_call.1} parent=1 // pred_check_branch
      %16 = sbr.rel (0) target = $region9
    $region8: #{tpu_custom_call.1} parent=1 // pred_region
      %s18 = ssub.s32 512, 512
      %19 = vsyncadd [#allocation4], %s18
      %s20 = sshll.u32 [#allocation3], 4
      %s21 = int_to_ptr.vmem [resolvable:$true] %s20
      %26 = dma.hbm_to_vmem [thread:$0]  %s1, 512, %s21, [#allocation4], 128, 128, 8
    $region9: #{tpu_custom_call.1} parent=1 // pred_fallthru
      _
    // Predicated region
    $region10: #{tpu_custom_call.1} parent=1 // pred_check
      _
    $region11: #{tpu_custom_call.1} parent=1 // pred_check_branch
      %28 = sbr.rel (0) target = $region13
    $region12: #{tpu_custom_call.1} parent=1 // pred_region
      _
    $region13: #{tpu_custom_call.1} parent=1 // pred_fallthru
      _
    // Predicated region
    $region14: #{tpu_custom_call.1} parent=1 // pred_check
      _
    $region15: #{tpu_custom_call.1} parent=1 // pred_check_branch
      %30 = sbr.rel (0) target = $region17
    $region16: #{tpu_custom_call.1} parent=1 // pred_region
      _
    $region17: #{tpu_custom_call.1} parent=1 // pred_fallthru
      _
    // Predicated region
    $region18: #{tpu_custom_call.1} parent=1 // pred_check
      _
    $region19: #{tpu_custom_call.1} parent=1 // pred_check_branch
      %32 = sbr.rel (0) target = $region21
    $region20: #{tpu_custom_call.1} parent=1 // pred_region
      _
    $region21: #{tpu_custom_call.1} parent=1 // pred_fallthru
      _
    // Predicated region
    $region22: #{tpu_custom_call.1} parent=1 // pred_check
      _
    $region23: #{tpu_custom_call.1} parent=1 // pred_check_branch
      %34 = sbr.rel (0) target = $region25
    $region24: #{tpu_custom_call.1} parent=1 // pred_region
      %35 = dma.done [#allocation4], 512
    $region25: #{tpu_custom_call.1} parent=1 // pred_fallthru
      _
    %v36 = vld [vmem:[%s0] sm:$0xff]
    %v37 = vld [vmem:[#allocation3] sm:$0xff]
    %v38 = vld [vmem:[#allocation3 + $0x8] sm:$0xff]
    %v39 = vld [vmem:[#allocation3 + $0x10] sm:$0xff]
    %v40 = vld [vmem:[#allocation3 + $0x18] sm:$0xff]
    %v41 = vld [vmem:[%s2] sm:$0x1]
    %v43 = vlaneseq
    %v44 = vshrl.u32 %v43, 7
    %v45 = vsub.s32 0, %v44
    %v46 = vrot.slane %v41, %v45
    %vm48 = vcmask 261120
    %v50 = vsel %vm48, %v36, 0
    %52 = vmatprep.subr.mxu0 0.0
    %53 = vmatpush1.msra.mxu0 %v37
    %54 = vmatprep.subr.mxu0 0.0
    %55 = vmatpush1.msra.mxu0 %v38
    %56 = vmatprep.subr.mxu0 0.0
    %57 = vmatpush1.msra.mxu0 %v39
    %58 = vmatprep.subr.mxu0 0.0
    %59 = vmatpush1.msra.mxu0 %v40
    %60 = vmatprep.subr.mxu0 0.0
    %61 = vmatpush1.msra.mxu0 0.0
    %62 = vmatprep.subr.mxu0 0.0
    %63 = vmatpush1.msra.mxu0 0.0
    %64 = vmatprep.subr.mxu0 0.0
    %65 = vmatpush1.msra.mxu0 0.0
    %66 = vmatprep.subr.mxu0 0.0
    %67 = vmatpush1.msra.mxu0 0.0
    %68 = vmatprep.subr.mxu0 0.0
    %69 = vmatpush1.msra.mxu0 0.0
    %70 = vmatprep.subr.mxu0 0.0
    %71 = vmatpush1.msra.mxu0 0.0
    %72 = vmatprep.subr.mxu0 0.0
    %73 = vmatpush1.msra.mxu0 0.0
    %74 = vmatprep.subr.mxu0 0.0
    %75 = vmatpush1.msra.mxu0 0.0
    %76 = vmatprep.subr.mxu0 0.0
    %77 = vmatpush1.msra.mxu0 0.0
    %78 = vmatprep.subr.mxu0 0.0
    %79 = vmatpush1.msra.mxu0 0.0
    %80 = vmatprep.subr.mxu0 0.0
    %81 = vmatpush1.msra.mxu0 0.0
    %82 = vmatprep.subr.mxu0 0.0
    %83 = vmatpush1.msra.mxu0 0.0
    %84 = vmatprep.subr.mxu0 0.0
    %85 = vmatpush1.msra.mxu0 0.0
    %86 = vmatprep.subr.mxu0 0.0
    %87 = vmatpush1.msra.mxu0 0.0
    %88 = vmatprep.subr.mxu0 0.0
    %89 = vmatpush1.msra.mxu0 0.0
    %90 = vmatprep.subr.mxu0 0.0
    %91 = vmatpush1.msra.mxu0 0.0
    %92 = vmatprep.subr.mxu0 0.0
    %93 = vmatpush1.msra.mxu0 0.0
    %94 = vmatprep.subr.mxu0 0.0
    %95 = vmatpush1.msra.mxu0 0.0
    %96 = vmatprep.subr.mxu0 0.0
    %97 = vmatpush1.msra.mxu0 0.0
    %98 = vmatprep.subr.mxu0 0.0
    %99 = vmatpush1.msra.mxu0 0.0
    %100 = vmatprep.subr.mxu0 0.0
    %101 = vmatpush1.msra.mxu0 0.0
    %102 = vmatprep.subr.mxu0 0.0
    %103 = vmatpush1.msra.mxu0 0.0
    %104 = vmatprep.subr.mxu0 0.0
    %105 = vmatpush1.msra.mxu0 0.0
    %106 = vmatprep.subr.mxu0 0.0
    %107 = vmatpush1.msra.mxu0 0.0
    %108 = vmatprep.subr.mxu0 0.0
    %109 = vmatpush1.msra.mxu0 0.0
    %110 = vmatprep.subr.mxu0 0.0
    %111 = vmatpush1.msra.mxu0 0.0
    %112 = vmatprep.subr.mxu0 0.0
    %113 = vmatpush1.msra.mxu0 0.0
    %114 = vmatprep.subr.mxu0 0.0
    %115 = vmatpush1.msra.mxu0 0.0
    %116 = vmatprep.mubr.f32.mxu0 0.0
    %117 = vmatmul.mubr.f32.gmra.mrb[0].mxu0 %v50
    %v118 = vpop.f32.mrb[0].mxu0
    %v119 = vadd.f32 %v46, %v118
    %v120 = vpop.f32.mrb[0].mxu0
    %121 = vdwg.mxu0
    %v122 = vtanh.pop %v119
    %v123 = vxor.u32 %v119, 2147483648
    %v124 = vmul.f32 %v123, 1.442695
    %v125 = vpow.pop %v124
    %v126 = vadd.f32 %v125, 1.0
    %v127 = vrcp.pop %v126
    %v128 = vmul.f32 1.0, %v127
    %130 = vrot.lane.b32.xlu0 %v128, 112
    %v131 = vpop.permute.xlu0 %130
    %v133 = vmul.f32 %v122, %v131
    %v134 = vld [vmem:[%s3] sm:$0xff]
    %v135 = vld [vmem:[%s3 + $0x8] sm:$0xff]
    %v136 = vld [vmem:[#allocation2] sm:$0x1]
    %v138 = vlaneseq
    %v139 = vshrl.u32 %v138, 7
    %v140 = vsub.s32 0, %v139
    %v141 = vrot.slane %v136, %v140
    %vm143 = vcmask 130048
    %v145 = vsel %vm143, %v133, 0
    %147 = vmatprep.subr.mxu0 0.0
    %148 = vmatpush1.msra.mxu0 %v134
    %149 = vmatprep.subr.mxu0 0.0
    %150 = vmatpush1.msra.mxu0 %v135
    %151 = vmatprep.subr.mxu0 0.0
    %152 = vmatpush1.msra.mxu0 0.0
    %153 = vmatprep.subr.mxu0 0.0
    %154 = vmatpush1.msra.mxu0 0.0
    %155 = vmatprep.subr.mxu0 0.0
    %156 = vmatpush1.msra.mxu0 0.0
    %157 = vmatprep.subr.mxu0 0.0
    %158 = vmatpush1.msra.mxu0 0.0
    %159 = vmatprep.subr.mxu0 0.0
    %160 = vmatpush1.msra.mxu0 0.0
    %161 = vmatprep.subr.mxu0 0.0
    %162 = vmatpush1.msra.mxu0 0.0
    %163 = vmatprep.subr.mxu0 0.0
    %164 = vmatpush1.msra.mxu0 0.0
    %165 = vmatprep.subr.mxu0 0.0
    %166 = vmatpush1.msra.mxu0 0.0
    %167 = vmatprep.subr.mxu0 0.0
    %168 = vmatpush1.msra.mxu0 0.0
    %169 = vmatprep.subr.mxu0 0.0
    %170 = vmatpush1.msra.mxu0 0.0
    %171 = vmatprep.subr.mxu0 0.0
    %172 = vmatpush1.msra.mxu0 0.0
    %173 = vmatprep.subr.mxu0 0.0
    %174 = vmatpush1.msra.mxu0 0.0
    %175 = vmatprep.subr.mxu0 0.0
    %176 = vmatpush1.msra.mxu0 0.0
    %177 = vmatprep.subr.mxu0 0.0
    %178 = vmatpush1.msra.mxu0 0.0
    %179 = vmatprep.subr.mxu0 0.0
    %180 = vmatpush1.msra.mxu0 0.0
    %181 = vmatprep.subr.mxu0 0.0
    %182 = vmatpush1.msra.mxu0 0.0
    %183 = vmatprep.subr.mxu0 0.0
    %184 = vmatpush1.msra.mxu0 0.0
    %185 = vmatprep.subr.mxu0 0.0
    %186 = vmatpush1.msra.mxu0 0.0
    %187 = vmatprep.subr.mxu0 0.0
    %188 = vmatpush1.msra.mxu0 0.0
    %189 = vmatprep.subr.mxu0 0.0
    %190 = vmatpush1.msra.mxu0 0.0
    %191 = vmatprep.subr.mxu0 0.0
    %192 = vmatpush1.msra.mxu0 0.0
    %193 = vmatprep.subr.mxu0 0.0
    %194 = vmatpush1.msra.mxu0 0.0
    %195 = vmatprep.subr.mxu0 0.0
    %196 = vmatpush1.msra.mxu0 0.0
    %197 = vmatprep.subr.mxu0 0.0
    %198 = vmatpush1.msra.mxu0 0.0
    %199 = vmatprep.subr.mxu0 0.0
    %200 = vmatpush1.msra.mxu0 0.0
    %201 = vmatprep.subr.mxu0 0.0
    %202 = vmatpush1.msra.mxu0 0.0
    %203 = vmatprep.subr.mxu0 0.0
    %204 = vmatpush1.msra.mxu0 0.0
    %205 = vmatprep.subr.mxu0 0.0
    %206 = vmatpush1.msra.mxu0 0.0
    %207 = vmatprep.subr.mxu0 0.0
    %208 = vmatpush1.msra.mxu0 0.0
    %209 = vmatprep.subr.mxu0 0.0
    %210 = vmatpush1.msra.mxu0 0.0
    %211 = vmatprep.mubr.f32.mxu0 0.0
    %212 = vmatmul.mubr.f32.gmra.mrb[0].mxu0 %v145
    %v213 = vpop.f32.mrb[0].mxu0
    %v214 = vadd.f32 %v141, %v213
    %v215 = vpop.f32.mrb[0].mxu0
    %216 = vdwg.mxu0
    %vm217 = vcmask 7168
    %218 = vst.msk [vmem:[%s5] sm:$0xff] %vm217, %v214
    // Predicated region
    $region26: #{tpu_custom_call.1} parent=1 // pred_check
      _
    $region27: #{tpu_custom_call.1} parent=1 // pred_check_branch
      %220 = sbr.rel (0) target = $region29
    $region28: #{tpu_custom_call.1} parent=1 // pred_region
      _
    $region29: #{tpu_custom_call.1} parent=1 // pred_fallthru
      _
    // Predicated region
    $region30: #{tpu_custom_call.1} parent=1 // pred_check
      _
    $region31: #{tpu_custom_call.1} parent=1 // pred_check_branch
      %222 = sbr.rel (0) target = $region33
    $region32: #{tpu_custom_call.1} parent=1 // pred_region
      _
    $region33: #{tpu_custom_call.1} parent=1 // pred_fallthru
      _
    %223 = vsyncpa [#allocation4], 1

</llo_original>
